<compile_context>
chip_gen: v7x
topology: tpu7x:2x2x1
jax: 0.10.0
libtpu: 0.0.40
codegen_flags: <defaults>
</compile_context>

<pallas_src>
import functools

import jax
import jax.numpy as jnp
from jax import lax
from jax.experimental import pallas as pl
from jax.experimental.pallas import tpu as pltpu


# --------------------------------------------------------------------------
# Weight preprocessing: block-Toeplitz expansion so the width (kw) taps fold
# into the matmul K dimension.
#
#   WT[kh, ((w + kw - 1) mod (W+2)) * Cin + ci,  w * Cout + co]
#       = w_hwio[kh, kw, ci, co]
#
# The "mod (W+2)" wraps the left-border tap onto the always-zero tail of the
# (W+2)-pixel padded row buffer, so the kernel can store the input row at lane
# offset 0 (no unaligned lane-offset store) and still get zero padding on both
# sides of the row.
# --------------------------------------------------------------------------
def _block_toeplitz(w_hwio, width):
    _, _, cin, cout = w_hwio.shape
    wp = width + 2
    blk = w_hwio.reshape(3, 3 * cin, cout)            # [kh, kw*cin+ci, co]
    r = jnp.arange(3 * cin)
    kw_idx = r // cin
    ci_idx = r % cin
    w_idx = jnp.arange(width)
    # lane index inside the padded row buffer for tap kw of output pixel w
    col = ((w_idx[:, None] + kw_idx[None, :] - 1) % wp) * cin + ci_idx[None, :]
    # placement matrix P[w, r, p] = 1  iff  p == col[w, r]
    P = (col[:, :, None] == jnp.arange(wp * cin)[None, None, :]).astype(
        w_hwio.dtype)                                  # (width, 3*cin, wp*cin)
    out = jnp.einsum("wrp,krc->kpwc", P, blk)          # (3, wp*cin, width, cout)
    return out.reshape(3, wp * cin, width * cout)


def _tile_bias(b, width):
    # b_tiled[w*Cout + co] = b[co]
    return jnp.tile(b, width).reshape(1, width * b.shape[0])


# --------------------------------------------------------------------------
# Fused kernel: one batch element per grid step.
#   x_ref   : (1, H, W*Cin)              input slab (NHWC flattened per row)
#   wt1_ref : (3, (W+2)*Cin,  W*Cmid)    block-Toeplitz weights, layer 1
#   b1_ref  : (1, W*Cmid)
#   wt2_ref : (3, (W+2)*Cmid, W*Cmid)    block-Toeplitz weights, layer 2
#   b2_ref  : (1, W*Cmid)
#   o_ref   : (1, H, W*Cmid)             output slab (lane-dense, 128 wide)
#   xpad_ref  : VMEM (H+2, (W+2)*Cin)    zero-padded layer-1 input
#   y1pad_ref : VMEM (H+2, (W+2)*Cmid)   zero-padded layer-1 output
# --------------------------------------------------------------------------
def _fused_conv2_kernel(x_ref, wt1_ref, b1_ref, wt2_ref, b2_ref, o_ref,
                        xpad_ref, y1pad_ref, *, H, W, c_in, c_mid):
    # ---------------- layer 1: in-kernel zero pad -------------------------
    xpad_ref[...] = jnp.zeros_like(xpad_ref)
    xpad_ref[1:H + 1, 0:W * c_in] = x_ref[0]

    acc = jnp.zeros((H, W * c_mid), dtype=jnp.float32)
    for kh in range(3):                      # taps along kw/ci folded into K
        acc += jnp.dot(xpad_ref[kh:kh + H, :], wt1_ref[kh],
                       preferred_element_type=jnp.float32)
    acc = acc + b1_ref[...]
    y1 = jnp.where(acc >= 0, acc, 0.2 * acc)            # LeakyReLU(0.2)

    # ---------------- layer 2: intermediate stays in VMEM -----------------
    y1pad_ref[...] = jnp.zeros_like(y1pad_ref)
    y1pad_ref[1:H + 1, 0:W * c_mid] = y1

    acc2 = jnp.zeros((H, W * c_mid), dtype=jnp.float32)
    for kh in range(3):
        acc2 += jnp.dot(y1pad_ref[kh:kh + H, :], wt2_ref[kh],
                        preferred_element_type=jnp.float32)
    acc2 = acc2 + b2_ref[...]
    y2 = jnp.where(acc2 >= 0, acc2, 0.2 * acc2)          # LeakyReLU(0.2)

    o_ref[0] = y2.astype(o_ref.dtype)                    # lane-dense store


def fused_conv_layer(x_nchw, w1_hwio, b1, w2_hwio, b2):
    """Fused [conv3x3 + LeakyReLU] x2, stride 1, pad 1.  NCHW in / NCHW out."""
    N, c_in, H, W = x_nchw.shape
    c_mid = w1_hwio.shape[-1]
    wp = W + 2

    # NCHW -> NHWC -> lane-dense (N, H, W*Cin) slab (reshape is layout-free).
    x = jnp.transpose(x_nchw, (0, 2, 3, 1)).reshape(N, H, W * c_in)

    wt1 = _block_toeplitz(w1_hwio, W)          # (3, wp*Cin,  W*Cmid)
    wt2 = _block_toeplitz(w2_hwio, W)          # (3, wp*Cmid, W*Cmid)
    b1t = _tile_bias(b1, W)                    # (1, W*Cmid)
    b2t = _tile_bias(b2, W)                    # (1, W*Cmid)

    kernel = functools.partial(_fused_conv2_kernel,
                               H=H, W=W, c_in=c_in, c_mid=c_mid)

    out = pl.pallas_call(
        kernel,
        out_shape=jax.ShapeDtypeStruct((N, H, W * c_mid), x.dtype),
        grid_spec=pltpu.PrefetchScalarGridSpec(
            num_scalar_prefetch=0,
            grid=(N,),
            in_specs=[
                pl.BlockSpec((1, H, W * c_in), lambda n: (n, 0, 0)),
                # grid-invariant weights / biases (would be Buffered(1) /
                # bf16 at production channel counts)
                pl.BlockSpec((3, wp * c_in, W * c_mid), lambda n: (0, 0, 0)),
                pl.BlockSpec((1, W * c_mid), lambda n: (0, 0)),
                pl.BlockSpec((3, wp * c_mid, W * c_mid), lambda n: (0, 0, 0)),
                pl.BlockSpec((1, W * c_mid), lambda n: (0, 0)),
            ],
            out_specs=pl.BlockSpec((1, H, W * c_mid), lambda n: (n, 0, 0)),
            scratch_shapes=[
                pltpu.VMEM((H + 2, wp * c_in), jnp.float32),
                pltpu.VMEM((H + 2, wp * c_mid), jnp.float32),
            ],
        ),
        compiler_params=pltpu.CompilerParams(
            dimension_semantics=("parallel",)),
    )(x, wt1, b1t, wt2, b2t)

    # (N, H, W*Cout) -> NHWC -> NCHW (to match the PyTorch module interface).
    return jnp.transpose(out.reshape(N, H, W, c_mid), (0, 3, 1, 2))


class ConvLayer:
    """JAX/Pallas port of the PyTorch Conv_layer module (forward pass)."""

    def __init__(self, in_channels, out_channels, key):
        k1, k2, k3, k4 = jax.random.split(key, 4)
        fan1 = in_channels * 9
        fan2 = out_channels * 9
        lim1 = 1.0 / jnp.sqrt(jnp.float32(fan1))
        lim2 = 1.0 / jnp.sqrt(jnp.float32(fan2))
        # weights in HWIO layout: (3, 3, Cin, Cout)
        self.w1 = jax.random.uniform(k1, (3, 3, in_channels, out_channels),
                                     jnp.float32, -lim1, lim1)
        self.b1 = jax.random.uniform(k2, (out_channels,), jnp.float32,
                                     -lim1, lim1)
        self.w2 = jax.random.uniform(k3, (3, 3, out_channels, out_channels),
                                     jnp.float32, -lim2, lim2)
        self.b2 = jax.random.uniform(k4, (out_channels,), jnp.float32,
                                     -lim2, lim2)

    @functools.partial(jax.jit, static_argnums=0)
    def forward(self, x_nchw):
        return fused_conv_layer(x_nchw, self.w1, self.b1, self.w2, self.b2)

    # TODO(synk): Conv_layer.loss (F.cross_entropy) is not part of the forward
    # pass and is not implemented as a Pallas kernel.


def _reference_forward(x_nchw, layer):
    """Pure-JAX reference using lax.conv_general_dilated (NHWC/HWIO)."""
    def conv(x, w, b):
        y = lax.conv_general_dilated(
            x, w, window_strides=(1, 1), padding=((1, 1), (1, 1)),
            dimension_numbers=("NHWC", "HWIO", "NHWC"))
        y = y + b[None, None, None, :]
        return jnp.where(y >= 0, y, 0.2 * y)

    x = jnp.transpose(x_nchw, (0, 2, 3, 1))
    y = conv(x, layer.w1, layer.b1)
    y = conv(y, layer.w2, layer.b2)
    return jnp.transpose(y, (0, 3, 1, 2))


if __name__ == "__main__":
    key = jax.random.PRNGKey(0)
    k_x, k_p = jax.random.split(key)

    # Small shapes consistent with the module: NCHW input
    N, Cin, H, W = 2, 4, 16, 16
    Cout = 8
    x = jax.random.normal(k_x, (N, Cin, H, W), jnp.float32)

    layer = ConvLayer(Cin, Cout, k_p)

    out = jax.block_until_ready(layer.forward(x))
    ref = jax.block_until_ready(_reference_forward(x, layer))

    assert out.shape == (N, Cout, H, W), out.shape
    assert jnp.allclose(out, ref, atol=1e-4, rtol=1e-4), "mismatch vs reference"

    print("KERNEL_OK")
</pallas_src>

<mosaic_0001>
module attributes {stable_mosaic.version = 11 : i64} {
  func.func @_fused_conv2_kernel(%arg0: i32, %arg1: memref<1x16x64xf32, #tpu.memory_space<vmem>>, %arg2: memref<3x72x128xf32, #tpu.memory_space<vmem>>, %arg3: memref<1x128xf32, #tpu.memory_space<vmem>>, %arg4: memref<3x144x128xf32, #tpu.memory_space<vmem>>, %arg5: memref<1x128xf32, #tpu.memory_space<vmem>>, %arg6: memref<1x16x128xf32, #tpu.memory_space<vmem>>, %arg7: memref<18x72xf32, #tpu.memory_space<vmem>>, %arg8: memref<18x144xf32, #tpu.memory_space<vmem>>) attributes {dimension_semantics = [#tpu.dimension_semantics<parallel>], iteration_bounds = array<i64: 2>, scalar_prefetch = 0 : i64, scratch_operands = 2 : i64, tpu.core_type = #tpu.core_type<tc>, window_params = [{transform_indices = @transform_0, window_bounds = array<i64: 1, 16, 64>}, {pipeline_mode = #tpu.pipeline_mode<synchronous>, transform_indices = @transform_1, window_bounds = array<i64: 3, 72, 128>}, {pipeline_mode = #tpu.pipeline_mode<synchronous>, transform_indices = @transform_2, window_bounds = array<i64: 1, 128>}, {pipeline_mode = #tpu.pipeline_mode<synchronous>, transform_indices = @transform_3, window_bounds = array<i64: 3, 144, 128>}, {pipeline_mode = #tpu.pipeline_mode<synchronous>, transform_indices = @transform_4, window_bounds = array<i64: 1, 128>}, {transform_indices = @transform_5, window_bounds = array<i64: 1, 16, 128>}]} {
    %cst = arith.constant 0.000000e+00 : f32
    %0 = vector.broadcast %cst : f32 to vector<18x72xf32>
    %c0 = arith.constant 0 : index
    %c0_0 = arith.constant 0 : index
    %1 = vector.load %arg7[%c0, %c0_0] : memref<18x72xf32, #tpu.memory_space<vmem>>, vector<18x72xf32>
    tpu.vector_store %arg7[%c0, %c0_0], %0 {strides = array<i32>} : memref<18x72xf32, #tpu.memory_space<vmem>>, vector<18x72xf32>,
    %c0_1 = arith.constant 0 : index
    %c0_2 = arith.constant 0 : index
    %c0_3 = arith.constant 0 : index
    %2 = vector.load %arg1[%c0_1, %c0_2, %c0_3] : memref<1x16x64xf32, #tpu.memory_space<vmem>>, vector<1x16x64xf32>
    %3 = vector.shape_cast %2 : vector<1x16x64xf32> to vector<16x64xf32>
    %c1 = arith.constant 1 : index
    %c0_4 = arith.constant 0 : index
    %4 = vector.load %arg7[%c1, %c0_4] : memref<18x72xf32, #tpu.memory_space<vmem>>, vector<16x64xf32>
    tpu.vector_store %arg7[%c1, %c0_4], %3 {strides = array<i32>} : memref<18x72xf32, #tpu.memory_space<vmem>>, vector<16x64xf32>,
    %cst_5 = arith.constant 0.000000e+00 : f32
    %5 = vector.broadcast %cst_5 : f32 to vector<16x128xf32>
    %c0_6 = arith.constant 0 : index
    %c0_7 = arith.constant 0 : index
    %6 = vector.load %arg7[%c0_6, %c0_7] : memref<18x72xf32, #tpu.memory_space<vmem>>, vector<16x72xf32>
    %c0_8 = arith.constant 0 : index
    %c0_9 = arith.constant 0 : index
    %c0_10 = arith.constant 0 : index
    %7 = vector.load %arg2[%c0_8, %c0_9, %c0_10] : memref<3x72x128xf32, #tpu.memory_space<vmem>>, vector<1x72x128xf32>
    %8 = vector.shape_cast %7 : vector<1x72x128xf32> to vector<72x128xf32>
    %cst_11 = arith.constant dense<0.000000e+00> : vector<16x128xf32>
    %9 = tpu.matmul %6, %8, %cst_11 {dimension_numbers = #tpu.dot_dimension_numbers<[1], [0], [0], [1], [0, 0, 1, 1], [], []>} : vector<16x72xf32>, vector<72x128xf32>, vector<16x128xf32> -> vector<16x128xf32>
    %10 = arith.addf %5, %9 : vector<16x128xf32>
    %c1_12 = arith.constant 1 : index
    %c0_13 = arith.constant 0 : index
    %11 = vector.load %arg7[%c1_12, %c0_13] : memref<18x72xf32, #tpu.memory_space<vmem>>, vector<16x72xf32>
    %c1_14 = arith.constant 1 : index
    %c0_15 = arith.constant 0 : index
    %c0_16 = arith.constant 0 : index
    %12 = vector.load %arg2[%c1_14, %c0_15, %c0_16] : memref<3x72x128xf32, #tpu.memory_space<vmem>>, vector<1x72x128xf32>
    %13 = vector.shape_cast %12 : vector<1x72x128xf32> to vector<72x128xf32>
    %cst_17 = arith.constant dense<0.000000e+00> : vector<16x128xf32>
    %14 = tpu.matmul %11, %13, %cst_17 {dimension_numbers = #tpu.dot_dimension_numbers<[1], [0], [0], [1], [0, 0, 1, 1], [], []>} : vector<16x72xf32>, vector<72x128xf32>, vector<16x128xf32> -> vector<16x128xf32>
    %15 = arith.addf %10, %14 : vector<16x128xf32>
    %c2 = arith.constant 2 : index
    %c0_18 = arith.constant 0 : index
    %16 = vector.load %arg7[%c2, %c0_18] : memref<18x72xf32, #tpu.memory_space<vmem>>, vector<16x72xf32>
    %c2_19 = arith.constant 2 : index
    %c0_20 = arith.constant 0 : index
    %c0_21 = arith.constant 0 : index
    %17 = vector.load %arg2[%c2_19, %c0_20, %c0_21] : memref<3x72x128xf32, #tpu.memory_space<vmem>>, vector<1x72x128xf32>
    %18 = vector.shape_cast %17 : vector<1x72x128xf32> to vector<72x128xf32>
    %cst_22 = arith.constant dense<0.000000e+00> : vector<16x128xf32>
    %19 = tpu.matmul %16, %18, %cst_22 {dimension_numbers = #tpu.dot_dimension_numbers<[1], [0], [0], [1], [0, 0, 1, 1], [], []>} : vector<16x72xf32>, vector<72x128xf32>, vector<16x128xf32> -> vector<16x128xf32>
    %20 = arith.addf %15, %19 : vector<16x128xf32>
    %c0_23 = arith.constant 0 : index
    %c0_24 = arith.constant 0 : index
    %21 = vector.load %arg3[%c0_23, %c0_24] : memref<1x128xf32, #tpu.memory_space<vmem>>, vector<1x128xf32>
    %22 = vector.broadcast %21 : vector<1x128xf32> to vector<16x128xf32>
    %23 = arith.addf %20, %22 : vector<16x128xf32>
    %cst_25 = arith.constant 0.000000e+00 : f32
    %24 = vector.broadcast %cst_25 : f32 to vector<16x128xf32>
    %25 = arith.cmpf oge, %23, %24 : vector<16x128xf32>
    %cst_26 = arith.constant 2.000000e-01 : f32
    %26 = vector.broadcast %cst_26 : f32 to vector<16x128xf32>
    %27 = arith.mulf %26, %23 : vector<16x128xf32>
    %28 = arith.select %25, %23, %27 : vector<16x128xi1>, vector<16x128xf32>
    %cst_27 = arith.constant 0.000000e+00 : f32
    %29 = vector.broadcast %cst_27 : f32 to vector<18x144xf32>
    %c0_28 = arith.constant 0 : index
    %c0_29 = arith.constant 0 : index
    %30 = vector.load %arg8[%c0_28, %c0_29] : memref<18x144xf32, #tpu.memory_space<vmem>>, vector<18x144xf32>
    tpu.vector_store %arg8[%c0_28, %c0_29], %29 {strides = array<i32>} : memref<18x144xf32, #tpu.memory_space<vmem>>, vector<18x144xf32>,
    %c1_30 = arith.constant 1 : index
    %c0_31 = arith.constant 0 : index
    %31 = vector.load %arg8[%c1_30, %c0_31] : memref<18x144xf32, #tpu.memory_space<vmem>>, vector<16x128xf32>
    tpu.vector_store %arg8[%c1_30, %c0_31], %28 {strides = array<i32>} : memref<18x144xf32, #tpu.memory_space<vmem>>, vector<16x128xf32>,
    %cst_32 = arith.constant 0.000000e+00 : f32
    %32 = vector.broadcast %cst_32 : f32 to vector<16x128xf32>
    %c0_33 = arith.constant 0 : index
    %c0_34 = arith.constant 0 : index
    %33 = vector.load %arg8[%c0_33, %c0_34] : memref<18x144xf32, #tpu.memory_space<vmem>>, vector<16x144xf32>
    %c0_35 = arith.constant 0 : index
    %c0_36 = arith.constant 0 : index
    %c0_37 = arith.constant 0 : index
    %34 = vector.load %arg4[%c0_35, %c0_36, %c0_37] : memref<3x144x128xf32, #tpu.memory_space<vmem>>, vector<1x144x128xf32>
    %35 = vector.shape_cast %34 : vector<1x144x128xf32> to vector<144x128xf32>
    %cst_38 = arith.constant dense<0.000000e+00> : vector<16x128xf32>
    %36 = tpu.matmul %33, %35, %cst_38 {dimension_numbers = #tpu.dot_dimension_numbers<[1], [0], [0], [1], [0, 0, 1, 1], [], []>} : vector<16x144xf32>, vector<144x128xf32>, vector<16x128xf32> -> vector<16x128xf32>
    %37 = arith.addf %32, %36 : vector<16x128xf32>
    %c1_39 = arith.constant 1 : index
    %c0_40 = arith.constant 0 : index
    %38 = vector.load %arg8[%c1_39, %c0_40] : memref<18x144xf32, #tpu.memory_space<vmem>>, vector<16x144xf32>
    %c1_41 = arith.constant 1 : index
    %c0_42 = arith.constant 0 : index
    %c0_43 = arith.constant 0 : index
    %39 = vector.load %arg4[%c1_41, %c0_42, %c0_43] : memref<3x144x128xf32, #tpu.memory_space<vmem>>, vector<1x144x128xf32>
    %40 = vector.shape_cast %39 : vector<1x144x128xf32> to vector<144x128xf32>
    %cst_44 = arith.constant dense<0.000000e+00> : vector<16x128xf32>
    %41 = tpu.matmul %38, %40, %cst_44 {dimension_numbers = #tpu.dot_dimension_numbers<[1], [0], [0], [1], [0, 0, 1, 1], [], []>} : vector<16x144xf32>, vector<144x128xf32>, vector<16x128xf32> -> vector<16x128xf32>
    %42 = arith.addf %37, %41 : vector<16x128xf32>
    %c2_45 = arith.constant 2 : index
    %c0_46 = arith.constant 0 : index
    %43 = vector.load %arg8[%c2_45, %c0_46] : memref<18x144xf32, #tpu.memory_space<vmem>>, vector<16x144xf32>
    %c2_47 = arith.constant 2 : index
    %c0_48 = arith.constant 0 : index
    %c0_49 = arith.constant 0 : index
    %44 = vector.load %arg4[%c2_47, %c0_48, %c0_49] : memref<3x144x128xf32, #tpu.memory_space<vmem>>, vector<1x144x128xf32>
    %45 = vector.shape_cast %44 : vector<1x144x128xf32> to vector<144x128xf32>
    %cst_50 = arith.constant dense<0.000000e+00> : vector<16x128xf32>
    %46 = tpu.matmul %43, %45, %cst_50 {dimension_numbers = #tpu.dot_dimension_numbers<[1], [0], [0], [1], [0, 0, 1, 1], [], []>} : vector<16x144xf32>, vector<144x128xf32>, vector<16x128xf32> -> vector<16x128xf32>
    %47 = arith.addf %42, %46 : vector<16x128xf32>
    %c0_51 = arith.constant 0 : index
    %c0_52 = arith.constant 0 : index
    %48 = vector.load %arg5[%c0_51, %c0_52] : memref<1x128xf32, #tpu.memory_space<vmem>>, vector<1x128xf32>
    %49 = vector.broadcast %48 : vector<1x128xf32> to vector<16x128xf32>
    %50 = arith.addf %47, %49 : vector<16x128xf32>
    %cst_53 = arith.constant 0.000000e+00 : f32
    %51 = vector.broadcast %cst_53 : f32 to vector<16x128xf32>
    %52 = arith.cmpf oge, %50, %51 : vector<16x128xf32>
    %cst_54 = arith.constant 2.000000e-01 : f32
    %53 = vector.broadcast %cst_54 : f32 to vector<16x128xf32>
    %54 = arith.mulf %53, %50 : vector<16x128xf32>
    %55 = arith.select %52, %50, %54 : vector<16x128xi1>, vector<16x128xf32>
    %c0_55 = arith.constant 0 : index
    %c0_56 = arith.constant 0 : index
    %c0_57 = arith.constant 0 : index
    %56 = vector.load %arg6[%c0_55, %c0_56, %c0_57] : memref<1x16x128xf32, #tpu.memory_space<vmem>>, vector<1x16x128xf32>
    %57 = vector.shape_cast %56 : vector<1x16x128xf32> to vector<16x128xf32>
    %58 = vector.shape_cast %55 : vector<16x128xf32> to vector<1x16x128xf32>
    tpu.vector_store %arg6[%c0_55, %c0_56, %c0_57], %58 {strides = array<i32>} : memref<1x16x128xf32, #tpu.memory_space<vmem>>, vector<1x16x128xf32>,
    return
  }
  func.func @transform_0(%arg0: i32) -> (i32, i32, i32) {
    %c0_i32 = arith.constant 0 : i32
    %c0_i32_0 = arith.constant 0 : i32
    %c0_i32_1 = arith.constant 0 : i32
    return %arg0, %c0_i32, %c0_i32_0 : i32, i32, i32
  }
  func.func @transform_1(%arg0: i32) -> (i32, i32, i32) {
    %c0_i32 = arith.constant 0 : i32
    %c0_i32_0 = arith.constant 0 : i32
    %c0_i32_1 = arith.constant 0 : i32
    %c0_i32_2 = arith.constant 0 : i32
    return %c0_i32, %c0_i32_0, %c0_i32_1 : i32, i32, i32
  }
  func.func @transform_2(%arg0: i32) -> (i32, i32) {
    %c0_i32 = arith.constant 0 : i32
    %c0_i32_0 = arith.constant 0 : i32
    %c0_i32_1 = arith.constant 0 : i32
    return %c0_i32, %c0_i32_0 : i32, i32
  }
  func.func @transform_3(%arg0: i32) -> (i32, i32, i32) {
    %c0_i32 = arith.constant 0 : i32
    %c0_i32_0 = arith.constant 0 : i32
    %c0_i32_1 = arith.constant 0 : i32
    %c0_i32_2 = arith.constant 0 : i32
    return %c0_i32, %c0_i32_0, %c0_i32_1 : i32, i32, i32
  }
  func.func @transform_4(%arg0: i32) -> (i32, i32) {
    %c0_i32 = arith.constant 0 : i32
    %c0_i32_0 = arith.constant 0 : i32
    %c0_i32_1 = arith.constant 0 : i32
    return %c0_i32, %c0_i32_0 : i32, i32
  }
  func.func @transform_5(%arg0: i32) -> (i32, i32, i32) {
    %c0_i32 = arith.constant 0 : i32
    %c0_i32_0 = arith.constant 0 : i32
    %c0_i32_1 = arith.constant 0 : i32
    return %arg0, %c0_i32, %c0_i32_0 : i32, i32, i32
  }
}

</mosaic_0001>

<llo_original>
// kernel: tile.10
$region0: #{tile.10}
  #allocation0 [shape = 's32[1]{0}', space=sflag, size = 0x4, scoped, tag = 'scoped memory for tile.10']
  %s0 = inlined_call_operand.vmem [shape: f32[8], index: 0, kind: input, shape index: {}]
  %s1 = inlined_call_operand.vmem [shape: f32[16,8], index: 1, kind: output, shape index: {}]
  // Predicated region
  $region2: #{tile.10} parent=0 // pred_check
    _
  $region3: #{tile.10} parent=0 // pred_check_branch
    %3 = sbr.rel (0) target = $region5
  $region4: #{tile.10} parent=0 // pred_region
    _
  $region5: #{tile.10} parent=0 // pred_fallthru
    _
  %v4 = vld [vmem:[%s0] ss:$0 sm:$0xff]
  %5 = vst [vmem:[%s1] sm:$0xff] %v4
  %s6 = scalar_lea.vmem %s1, 8
  %7 = vst [vmem:[%s6] sm:$0xff] %v4

// kernel: tile.11
$region0: #{tile.11}
  %s0 = inlined_call_operand.vmem [shape: f32[16,8], index: 0, kind: input, shape index: {}]
  %s1 = inlined_call_operand.vmem [shape: f32[1,128], index: 1, kind: output, shape index: {}]
  $region1: #{tile.11} parent=0
    #allocation0 [shape = 'u8[4096]{0}', space=vmem, size = 0x1000, scoped, tag = 'scoped mem for output reshape']
    %v2 = vld [vmem:[%s0] sm:$0x1]
    %vm3 = vcmask 64512
    %4 = vst.msk [vmem:[#allocation0] sm:$0x1] %vm3, %v2
    %s5 = scalar_lea.vmem %s0, 15
    %v6 = vld [vmem:[%s5] sm:$0x1]
    %7 = vrot.lane.b32.xlu0 %v6, 120
    %v8 = vpop.permute.xlu0 %7
    %vm9 = vcmask 1048512
    %10 = vst.msk [vmem:[#allocation0] sm:$0x1] %vm9, %v8
    %s11 = scalar_lea.vmem %s0, 14
    %v12 = vld [vmem:[%s11] sm:$0x1]
    %13 = vrot.lane.b32.xlu0 %v12, 112
    %v14 = vpop.permute.xlu0 %13
    %vm15 = vcmask 982912
    %16 = vst.msk [vmem:[#allocation0] sm:$0x1] %vm15, %v14
    %s17 = scalar_lea.vmem %s0, 13
    %v18 = vld [vmem:[%s17] sm:$0x1]
    %19 = vrot.lane.b32.xlu0 %v18, 104
    %v20 = vpop.permute.xlu0 %19
    %vm21 = vcmask 917312
    %22 = vst.msk [vmem:[#allocation0] sm:$0x1] %vm21, %v20
    %s23 = scalar_lea.vmem %s0, 12
    %v24 = vld [vmem:[%s23] sm:$0x1]
    %25 = vrot.lane.b32.xlu0 %v24, 96
    %v26 = vpop.permute.xlu0 %25
    %vm27 = vcmask 851712
    %28 = vst.msk [vmem:[#allocation0] sm:$0x1] %vm27, %v26
    %s29 = scalar_lea.vmem %s0, 11
    %v30 = vld [vmem:[%s29] sm:$0x1]
    %31 = vrot.lane.b32.xlu0 %v30, 88
    %v32 = vpop.permute.xlu0 %31
    %vm33 = vcmask 786112
    %34 = vst.msk [vmem:[#allocation0] sm:$0x1] %vm33, %v32
    %s35 = scalar_lea.vmem %s0, 10
    %v36 = vld [vmem:[%s35] sm:$0x1]
    %37 = vrot.lane.b32.xlu0 %v36, 80
    %v38 = vpop.permute.xlu0 %37
    %vm39 = vcmask 720512
    %40 = vst.msk [vmem:[#allocation0] sm:$0x1] %vm39, %v38
    %s41 = scalar_lea.vmem %s0, 9
    %v42 = vld [vmem:[%s41] sm:$0x1]
    %43 = vrot.lane.b32.xlu0 %v42, 72
    %v44 = vpop.permute.xlu0 %43
    %vm45 = vcmask 654912
    %46 = vst.msk [vmem:[#allocation0] sm:$0x1] %vm45, %v44
    %s47 = scalar_lea.vmem %s0, 8
    %v48 = vld [vmem:[%s47] sm:$0x1]
    %49 = vrot.lane.b32.xlu0 %v48, 64
    %v50 = vpop.permute.xlu0 %49
    %vm51 = vcmask 589312
    %52 = vst.msk [vmem:[#allocation0] sm:$0x1] %vm51, %v50
    %s53 = scalar_lea.vmem %s0, 7
    %v54 = vld [vmem:[%s53] sm:$0x1]
    %55 = vrot.lane.b32.xlu0 %v54, 56
    %v56 = vpop.permute.xlu0 %55
    %vm57 = vcmask 523712
    %58 = vst.msk [vmem:[#allocation0] sm:$0x1] %vm57, %v56
    %s59 = scalar_lea.vmem %s0, 6
    %v60 = vld [vmem:[%s59] sm:$0x1]
    %61 = vrot.lane.b32.xlu0 %v60, 48
    %v62 = vpop.permute.xlu0 %61
    %vm63 = vcmask 458112
    %64 = vst.msk [vmem:[#allocation0] sm:$0x1] %vm63, %v62
    %s65 = scalar_lea.vmem %s0, 5
    %v66 = vld [vmem:[%s65] sm:$0x1]
    %67 = vrot.lane.b32.xlu0 %v66, 40
    %v68 = vpop.permute.xlu0 %67
    %vm69 = vcmask 392512
    %70 = vst.msk [vmem:[#allocation0] sm:$0x1] %vm69, %v68
    %s71 = scalar_lea.vmem %s0, 4
    %v72 = vld [vmem:[%s71] sm:$0x1]
    %73 = vrot.lane.b32.xlu0 %v72, 32
    %v74 = vpop.permute.xlu0 %73
    %vm75 = vcmask 326912
    %76 = vst.msk [vmem:[#allocation0] sm:$0x1] %vm75, %v74
    %s77 = scalar_lea.vmem %s0, 3
    %v78 = vld [vmem:[%s77] sm:$0x1]
    %79 = vrot.lane.b32.xlu0 %v78, 24
    %v80 = vpop.permute.xlu0 %79
    %vm81 = vcmask 261312
    %82 = vst.msk [vmem:[#allocation0] sm:$0x1] %vm81, %v80
    %s83 = scalar_lea.vmem %s0, 2
    %v84 = vld [vmem:[%s83] sm:$0x1]
    %85 = vrot.lane.b32.xlu0 %v84, 16
    %v86 = vpop.permute.xlu0 %85
    %vm87 = vcmask 195712
    %88 = vst.msk [vmem:[#allocation0] sm:$0x1] %vm87, %v86
    %s89 = scalar_lea.vmem %s0, 1
    %v90 = vld [vmem:[%s89] sm:$0x1]
    %91 = vrot.lane.b32.xlu0 %v90, 8
    %v92 = vpop.permute.xlu0 %91
    %vm93 = vcmask 130112
    %94 = vst.msk [vmem:[#allocation0] sm:$0x1] %vm93, %v92
    %s96 = sshllo.u32 0, 1
    %v98 = vld [vmem:[#allocation0] sm:%s96]
    %s99 = sshllo.u32 0, 1
    %100 = vst [vmem:[%s1] sm:%s99] %v98

// kernel: forward.1
$region0: #{forward.1}
  #allocation0 [shape = 'u32[]', space=smem, size = 0x4, offset = 0x4, fixed_abs, tag = 'smem constant byte address 0x4 - core index']
  #allocation1 [shape = 'u32[144,128]{1,0:T(1,128)}', space=vmem, size = 0x12000, scoped, tag = 'internal scratch']
  #allocation2 [shape = 'f32[18,72]{1,0:T(8,128)}', space=vmem, size = 0x3000, scoped, tag = 'scratch operand']
  #allocation3 [shape = 'f32[18,144]{1,0:T(8,128)}', space=vmem, size = 0x6000, scoped, tag = 'scratch operand']
  %s0 = inlined_call_operand.vmem [shape: f32[2,16,64], index: 0, kind: input, shape index: {}]
  %s1 = inlined_call_operand.vmem [shape: f32[3,72,128], index: 1, kind: input, shape index: {}]
  %s2 = inlined_call_operand.vmem [shape: f32[1,128], index: 2, kind: input, shape index: {}]
  %s3 = inlined_call_operand.vmem [shape: f32[3,144,128], index: 3, kind: input, shape index: {}]
  %s4 = inlined_call_operand.vmem [shape: f32[1,128], index: 4, kind: input, shape index: {}]
  %s5 = inlined_call_operand.vmem [shape: f32[2,16,128], index: 5, kind: output, shape index: {}]
  %s6 = sld [smem:[#allocation0]]
  $region53: #{forward.1} parent=0
    _
  %s8 = ssub.s32 1, %s6
  %s9 = scalar_select 0, %s8, %s6
  loop: start=0, step=1, limit=4
  $region2: #{forward.1} parent=0 // loop_pre_header
    _
  $region3: #{forward.1} parent=0 // loop_header
    %s11 = sphi 0, %s15
    %p12 = scmp.ge.s32.totalorder %s11, 4
    %s21 = sphi 0, %s23
    %s24 = sphi 0, %s21
    %s25 = sphi 0, %s24
    %s41 = sphi 0, %s25
    %s45 = sphi 0, %s45
    %s47 = sphi 0, %s45
    %s48 = sphi 0, %s47
    %s62 = sphi 0, %s48
    %s66 = sphi 0, %s66
    %s68 = sphi 0, %s66
    %s69 = sphi 0, %s68
    %s83 = sphi 0, %s69
    %s87 = sphi 0, %s87
    %s89 = sphi 0, %s87
    %s90 = sphi 0, %s89
    %s104 = sphi 0, %s90
    %s108 = sphi 0, %s108
    %s110 = sphi 0, %s108
    %s111 = sphi 0, %s110
    %s125 = sphi 0, %s111
    %s131 = sphi 0, %s133
    %s134 = sphi 0, %s131
    %s135 = sphi 0, %s134
    %s151 = sphi 0, %s135
  $region4: #{forward.1} parent=0 // loop_header_branch
    %14 = sbr.rel (%p12) target = $region8
  $region5: #{forward.1} parent=0 // loop_body
    %s16 = ssub.s32 %s11, 1
    %s17 = ssub.s32 %s11, 2
    %s18 = sadd.s32 %s11, 1
    %s19 = ssub.s32 %s11, %s18
    %p20 = scmp.eq.s32.totalorder %s19, 0
    %s22 = sadd.s32 %s21, 1
    %s23 = scalar_select %p20, %s21, %s22
    %p26 = pneg %p20
    %p27 = scmp.eq.s32.totalorder %s11, 1
    %p28 = por %p26, %p27
    %p29 = scmp.ne.s32.totalorder %s21, %s24
    %p30 = scmp.eq.s32.totalorder %s11, 0
    %p31 = por %p29, %p30
    %p32 = scmp.ne.s32.totalorder %s21, %s24
    %p33 = scmp.eq.s32.totalorder %s16, 1
    %p34 = por %p32, %p33
    %p35 = scmp.ne.s32.totalorder %s24, %s25
    %p36 = scmp.eq.s32.totalorder %s16, 0
    %p37 = por %p35, %p36
    %p38 = scmp.ne.s32.totalorder %s24, %s25
    %p39 = scmp.eq.s32.totalorder %s17, 1
    %p40 = por %p38, %p39
    %p42 = scmp.ne.s32.totalorder %s25, %s41
    %p43 = scmp.eq.s32.totalorder %s17, 0
    %p44 = por %p42, %p43
    %s46 = sadd.s32 %s45, 1
    %p49 = scmp.eq.s32.totalorder %s11, 1
    %p50 = scmp.ne.s32.totalorder %s45, %s47
    %p51 = scmp.eq.s32.totalorder %s11, 0
    %p52 = por %p50, %p51
    %p53 = scmp.ne.s32.totalorder %s45, %s47
    %p54 = scmp.eq.s32.totalorder %s16, 1
    %p55 = por %p53, %p54
    %p56 = scmp.ne.s32.totalorder %s47, %s48
    %p57 = scmp.eq.s32.totalorder %s16, 0
    %p58 = por %p56, %p57
    %p59 = scmp.ne.s32.totalorder %s47, %s48
    %p60 = scmp.eq.s32.totalorder %s17, 1
    %p61 = por %p59, %p60
    %p63 = scmp.ne.s32.totalorder %s48, %s62
    %p64 = scmp.eq.s32.totalorder %s17, 0
    %p65 = por %p63, %p64
    %s67 = sadd.s32 %s66, 1
    %p70 = scmp.eq.s32.totalorder %s11, 1
    %p71 = scmp.ne.s32.totalorder %s66, %s68
    %p72 = scmp.eq.s32.totalorder %s11, 0
    %p73 = por %p71, %p72
    %p74 = scmp.ne.s32.totalorder %s66, %s68
    %p75 = scmp.eq.s32.totalorder %s16, 1
    %p76 = por %p74, %p75
    %p77 = scmp.ne.s32.totalorder %s68, %s69
    %p78 = scmp.eq.s32.totalorder %s16, 0
    %p79 = por %p77, %p78
    %p80 = scmp.ne.s32.totalorder %s68, %s69
    %p81 = scmp.eq.s32.totalorder %s17, 1
    %p82 = por %p80, %p81
    %p84 = scmp.ne.s32.totalorder %s69, %s83
    %p85 = scmp.eq.s32.totalorder %s17, 0
    %p86 = por %p84, %p85
    %s88 = sadd.s32 %s87, 1
    %p91 = scmp.eq.s32.totalorder %s11, 1
    %p92 = scmp.ne.s32.totalorder %s87, %s89
    %p93 = scmp.eq.s32.totalorder %s11, 0
    %p94 = por %p92, %p93
    %p95 = scmp.ne.s32.totalorder %s87, %s89
    %p96 = scmp.eq.s32.totalorder %s16, 1
    %p97 = por %p95, %p96
    %p98 = scmp.ne.s32.totalorder %s89, %s90
    %p99 = scmp.eq.s32.totalorder %s16, 0
    %p100 = por %p98, %p99
    %p101 = scmp.ne.s32.totalorder %s89, %s90
    %p102 = scmp.eq.s32.totalorder %s17, 1
    %p103 = por %p101, %p102
    %p105 = scmp.ne.s32.totalorder %s90, %s104
    %p106 = scmp.eq.s32.totalorder %s17, 0
    %p107 = por %p105, %p106
    %s109 = sadd.s32 %s108, 1
    %p112 = scmp.eq.s32.totalorder %s11, 1
    %p113 = scmp.ne.s32.totalorder %s108, %s110
    %p114 = scmp.eq.s32.totalorder %s11, 0
    %p115 = por %p113, %p114
    %p116 = scmp.ne.s32.totalorder %s108, %s110
    %p117 = scmp.eq.s32.totalorder %s16, 1
    %p118 = por %p116, %p117
    %p119 = scmp.ne.s32.totalorder %s110, %s111
    %p120 = scmp.eq.s32.totalorder %s16, 0
    %p121 = por %p119, %p120
    %p122 = scmp.ne.s32.totalorder %s110, %s111
    %p123 = scmp.eq.s32.totalorder %s17, 1
    %p124 = por %p122, %p123
    %p126 = scmp.ne.s32.totalorder %s111, %s125
    %p127 = scmp.eq.s32.totalorder %s17, 0
    %p128 = por %p126, %p127
    %s129 = ssub.s32 %s11, %s18
    %p130 = scmp.eq.s32.totalorder %s129, 0
    %s132 = sadd.s32 %s131, 1
    %s133 = scalar_select %p130, %s131, %s132
    %p136 = pneg %p130
    %p137 = scmp.eq.s32.totalorder %s11, 1
    %p138 = por %p136, %p137
    %p139 = scmp.ne.s32.totalorder %s131, %s134
    %p140 = scmp.eq.s32.totalorder %s11, 0
    %p141 = por %p139, %p140
    %p142 = scmp.ne.s32.totalorder %s131, %s134
    %p143 = scmp.eq.s32.totalorder %s16, 1
    %p144 = por %p142, %p143
    %p145 = scmp.ne.s32.totalorder %s134, %s135
    %p146 = scmp.eq.s32.totalorder %s16, 0
    %p147 = por %p145, %p146
    %p148 = scmp.ne.s32.totalorder %s134, %s135
    %p149 = scmp.eq.s32.totalorder %s17, 1
    %p150 = por %p148, %p149
    %p152 = scmp.ne.s32.totalorder %s135, %s151
    %p153 = scmp.eq.s32.totalorder %s17, 0
    %p154 = por %p152, %p153
    %p155 = scmp.le.s32.totalorder 1, %s11
    %p156 = scmp.lt.s32.totalorder %s11, 3
    %p157 = pnand %p155, %p156
    %p158 = pneg %p157
    // Predicated region
    $region9: #{forward.1} parent=5 // pred_check
      _
    $region10: #{forward.1} parent=5 // pred_check_branch
      %160 = sbr.rel (%p157) target = $region12
    $region11: #{forward.1} parent=5 // pred_region
      %s161 = ssub.s32 %s11, 1
      // Predicated region
      $region13: #{forward.1} parent=11 // pred_check
        %p162 = pneg %p58
      $region14: #{forward.1} parent=11 // pred_check_branch
        %164 = sbr.rel (%p162) target = $region16
      $region15: #{forward.1} parent=11 // pred_region
        _
      $region16: #{forward.1} parent=11 // pred_fallthru
        _
      // Predicated region
      $region17: #{forward.1} parent=11 // pred_check
        %p165 = pneg %p79
      $region18: #{forward.1} parent=11 // pred_check_branch
        %167 = sbr.rel (%p165) target = $region20
      $region19: #{forward.1} parent=11 // pred_region
        _
      $region20: #{forward.1} parent=11 // pred_fallthru
        _
      // Predicated region
      $region21: #{forward.1} parent=11 // pred_check
        %p168 = pneg %p100
      $region22: #{forward.1} parent=11 // pred_check_branch
        %170 = sbr.rel (%p168) target = $region24
      $region23: #{forward.1} parent=11 // pred_region
        _
      $region24: #{forward.1} parent=11 // pred_fallthru
        _
      // Predicated region
      $region25: #{forward.1} parent=11 // pred_check
        %p171 = pneg %p121
      $region26: #{forward.1} parent=11 // pred_check_branch
        %173 = sbr.rel (%p171) target = $region28
      $region27: #{forward.1} parent=11 // pred_region
        _
      $region28: #{forward.1} parent=11 // pred_fallthru
        _
    $region12: #{forward.1} parent=5 // pred_fallthru
      _
    %p174 = scmp.lt.s32.totalorder %s11, 2
    // Predicated region
    $region29: #{forward.1} parent=5 // pred_check
      %p175 = pneg %p174
    $region30: #{forward.1} parent=5 // pred_check_branch
      %177 = sbr.rel (%p175) target = $region32
    $region31: #{forward.1} parent=5 // pred_region
      // Predicated region
      $region33: #{forward.1} parent=31 // pred_check
        %p178 = pneg %p31
      $region34: #{forward.1} parent=31 // pred_check_branch
        %180 = sbr.rel (%p178) target = $region36
      $region35: #{forward.1} parent=31 // pred_region
        %p181 = scmp.lt.s32.totalorder %s11, 1
        %s182 = scalar_select %p181, %s11, 1
        %s183 = smul.addr %s182, 2
        %s184 = smul.addr %s183, 8
        %s185 = scalar_lea.vmem %s0, %s184
      $region36: #{forward.1} parent=31 // pred_fallthru
        _
    $region32: #{forward.1} parent=5 // pred_fallthru
      _
    %p186 = scmp.le.s32.totalorder 1, %s11
    %p187 = scmp.lt.s32.totalorder %s11, 3
    %p188 = pnand %p186, %p187
    %p189 = pneg %p188
    // Predicated region
    $region37: #{forward.1} parent=5 // pred_check
      _
    $region38: #{forward.1} parent=5 // pred_check_branch
      %191 = sbr.rel (%p188) target = $region40
    $region39: #{forward.1} parent=5 // pred_region
      %s192 = ssub.s32 %s11, 1
      %p193 = scmp.lt.s32.totalorder %s16, 1
      %s194 = scalar_select %p193, %s16, 1
      %s195 = smul.addr %s194, 2
      %s196 = smul.addr %s195, 8
      %s197 = scalar_lea.vmem %s0, %s196
      %p198 = pneg %p37
      %p199 = pneg %p34
      %p200 = pneg %p58
      %p201 = pneg %p55
      %p202 = pneg %p79
      %p203 = pneg %p76
      %p204 = pneg %p100
      %p205 = pneg %p97
      %p206 = pneg %p121
      %p207 = pneg %p118
      %p208 = pneg %p147
      %p209 = pneg %p144
      %p210 = scmp.lt.s32.totalorder %s16, 1
      %s211 = scalar_select %p210, %s16, 1
      %s212 = smul.addr %s211, 2
      %s213 = smul.addr %s212, 8
      %s214 = scalar_lea.vmem %s5, %s213
      %p215 = scmp.lt.s32.totalorder %s16, 1
      %s216 = scalar_select %p215, %s16, 1
      %s217 = smul.addr %s216, 2
      %s218 = smul.addr %s217, 8
      %s219 = scalar_lea.vmem %s0, %s218
      %p220 = scmp.lt.s32.totalorder %s16, 1
      %s221 = scalar_select %p220, %s16, 1
      %s222 = smul.addr %s221, 2
      %s223 = smul.addr %s222, 8
      %s224 = scalar_lea.vmem %s5, %s223
      %vm225 = vcmask 588800
      %226 = vst.msk [vmem:[#allocation2] sm:$0xff] %vm225, 0.0
      %227 = vst.msk [vmem:[#allocation2 + $0x8] sm:$0xff] %vm225, 0.0
      %vm228 = vcmask 582656
      %229 = vst.msk [vmem:[#allocation2 + $0x10] sm:$0x3] %vm228, 0.0
      %v230 = vld [vmem:[%s219] sm:$0xff]
      %v231 = vld [vmem:[%s219 + $0x8] sm:$0xff]
      %vm232 = vcmask 523264
      %233 = vst.msk [vmem:[#allocation2 + $0x1] sm:$0xff] %vm232, %v230
      %234 = vst.msk [vmem:[#allocation2 + $0x9] sm:$0xff] %vm232, %v231
      %v235 = vld [vmem:[#allocation2] sm:$0xff]
      %v236 = vld [vmem:[#allocation2 + $0x8] sm:$0xff]
      %v237 = vld [vmem:[%s1] sm:$0xff]
      %v238 = vld [vmem:[%s1 + $0x8] sm:$0xff]
      %v239 = vld [vmem:[%s1 + $0x10] sm:$0xff]
      %v240 = vld [vmem:[%s1 + $0x18] sm:$0xff]
      %v241 = vld [vmem:[%s1 + $0x20] sm:$0xff]
      %v242 = vld [vmem:[%s1 + $0x28] sm:$0xff]
      %v243 = vld [vmem:[%s1 + $0x30] sm:$0xff]
      %v244 = vld [vmem:[%s1 + $0x38] sm:$0xff]
      %v245 = vld [vmem:[%s1 + $0x40] sm:$0xff]
      %v246 = vld [vmem:[#allocation2 + $0x1] sm:$0xff]
      %v247 = vld [vmem:[#allocation2 + $0x9] sm:$0xff]
      %s248 = scalar_lea.vmem %s1, 72
      %v249 = vld [vmem:[%s248] sm:$0xff]
      %v250 = vld [vmem:[%s248 + $0x8] sm:$0xff]
      %v251 = vld [vmem:[%s248 + $0x10] sm:$0xff]
      %v252 = vld [vmem:[%s248 + $0x18] sm:$0xff]
      %v253 = vld [vmem:[%s248 + $0x20] sm:$0xff]
      %v254 = vld [vmem:[%s248 + $0x28] sm:$0xff]
      %v255 = vld [vmem:[%s248 + $0x30] sm:$0xff]
      %v256 = vld [vmem:[%s248 + $0x38] sm:$0xff]
      %v257 = vld [vmem:[%s248 + $0x40] sm:$0xff]
      %v259 = vsel %vm225, %v246, 0
      %v262 = vsel %vm225, %v247, 0
      %264 = vmatprep.subr.mxu0 0.0
      %265 = vmatpush1.msra.mxu0 %v249
      %266 = vmatprep.subr.mxu0 0.0
      %267 = vmatpush1.msra.mxu0 %v250
      %268 = vmatprep.subr.mxu0 0.0
      %269 = vmatpush1.msra.mxu0 %v251
      %270 = vmatprep.subr.mxu0 0.0
      %271 = vmatpush1.msra.mxu0 %v252
      %272 = vmatprep.subr.mxu0 0.0
      %273 = vmatpush1.msra.mxu0 %v253
      %274 = vmatprep.subr.mxu0 0.0
      %275 = vmatpush1.msra.mxu0 %v254
      %276 = vmatprep.subr.mxu0 0.0
      %277 = vmatpush1.msra.mxu0 %v255
      %278 = vmatprep.subr.mxu0 0.0
      %279 = vmatpush1.msra.mxu0 %v256
      %280 = vmatprep.subr.mxu0 0.0
      %281 = vmatpush1.msra.mxu0 %v257
      %282 = vmatprep.subr.mxu0 0.0
      %283 = vmatpush1.msra.mxu0 0.0
      %284 = vmatprep.subr.mxu0 0.0
      %285 = vmatpush1.msra.mxu0 0.0
      %286 = vmatprep.subr.mxu0 0.0
      %287 = vmatpush1.msra.mxu0 0.0
      %288 = vmatprep.subr.mxu0 0.0
      %289 = vmatpush1.msra.mxu0 0.0
      %290 = vmatprep.subr.mxu0 0.0
      %291 = vmatpush1.msra.mxu0 0.0
      %292 = vmatprep.subr.mxu0 0.0
      %293 = vmatpush1.msra.mxu0 0.0
      %294 = vmatprep.subr.mxu0 0.0
      %295 = vmatpush1.msra.mxu0 0.0
      %296 = vmatprep.subr.mxu0 0.0
      %297 = vmatpush1.msra.mxu0 0.0
      %298 = vmatprep.subr.mxu0 0.0
      %299 = vmatpush1.msra.mxu0 0.0
      %300 = vmatprep.subr.mxu0 0.0
      %301 = vmatpush1.msra.mxu0 0.0
      %302 = vmatprep.subr.mxu0 0.0
      %303 = vmatpush1.msra.mxu0 0.0
      %304 = vmatprep.subr.mxu0 0.0
      %305 = vmatpush1.msra.mxu0 0.0
      %306 = vmatprep.subr.mxu0 0.0
      %307 = vmatpush1.msra.mxu0 0.0
      %308 = vmatprep.subr.mxu0 0.0
      %309 = vmatpush1.msra.mxu0 0.0
      %310 = vmatprep.subr.mxu0 0.0
      %311 = vmatpush1.msra.mxu0 0.0
      %312 = vmatprep.subr.mxu0 0.0
      %313 = vmatpush1.msra.mxu0 0.0
      %314 = vmatprep.subr.mxu0 0.0
      %315 = vmatpush1.msra.mxu0 0.0
      %316 = vmatprep.subr.mxu0 0.0
      %317 = vmatpush1.msra.mxu0 0.0
      %318 = vmatprep.subr.mxu0 0.0
      %319 = vmatpush1.msra.mxu0 0.0
      %320 = vmatprep.subr.mxu0 0.0
      %321 = vmatpush1.msra.mxu0 0.0
      %322 = vmatprep.subr.mxu0 0.0
      %323 = vmatpush1.msra.mxu0 0.0
      %324 = vmatprep.subr.mxu0 0.0
      %325 = vmatpush1.msra.mxu0 0.0
      %326 = vmatprep.subr.mxu0 0.0
      %327 = vmatpush1.msra.mxu0 0.0
      %328 = vmatprep.mubr.f32.mxu0 0.0
      %329 = vmatmul.mubr.f32.gmra.mrb[0].mxu0 %v259
      %v330 = vpop.f32.mrb[0].mxu0
      %v331 = vadd.f32 0.0, %v330
      %v332 = vpop.f32.mrb[0].mxu0
      %333 = vmatprep.mubr.f32.mxu0 0.0
      %334 = vmatmul.mubr.f32.gmra.mrb[0].mxu0 %v262
      %v335 = vpop.f32.mrb[0].mxu0
      %v336 = vadd.f32 0.0, %v335
      %v337 = vpop.f32.mrb[0].mxu0
      %338 = vdwg.mxu0
      %v340 = vsel %vm225, %v235, 0
      %v343 = vsel %vm225, %v236, 0
      %345 = vmatprep.subr.mxu0 0.0
      %346 = vmatpush1.msra.mxu0 %v237
      %347 = vmatprep.subr.mxu0 0.0
      %348 = vmatpush1.msra.mxu0 %v238
      %349 = vmatprep.subr.mxu0 0.0
      %350 = vmatpush1.msra.mxu0 %v239
      %351 = vmatprep.subr.mxu0 0.0
      %352 = vmatpush1.msra.mxu0 %v240
      %353 = vmatprep.subr.mxu0 0.0
      %354 = vmatpush1.msra.mxu0 %v241
      %355 = vmatprep.subr.mxu0 0.0
      %356 = vmatpush1.msra.mxu0 %v242
      %357 = vmatprep.subr.mxu0 0.0
      %358 = vmatpush1.msra.mxu0 %v243
      %359 = vmatprep.subr.mxu0 0.0
      %360 = vmatpush1.msra.mxu0 %v244
      %361 = vmatprep.subr.mxu0 0.0
      %362 = vmatpush1.msra.mxu0 %v245
      %363 = vmatprep.subr.mxu0 0.0
      %364 = vmatpush1.msra.mxu0 0.0
      %365 = vmatprep.subr.mxu0 0.0
      %366 = vmatpush1.msra.mxu0 0.0
      %367 = vmatprep.subr.mxu0 0.0
      %368 = vmatpush1.msra.mxu0 0.0
      %369 = vmatprep.subr.mxu0 0.0
      %370 = vmatpush1.msra.mxu0 0.0
      %371 = vmatprep.subr.mxu0 0.0
      %372 = vmatpush1.msra.mxu0 0.0
      %373 = vmatprep.subr.mxu0 0.0
      %374 = vmatpush1.msra.mxu0 0.0
      %375 = vmatprep.subr.mxu0 0.0
      %376 = vmatpush1.msra.mxu0 0.0
      %377 = vmatprep.subr.mxu0 0.0
      %378 = vmatpush1.msra.mxu0 0.0
      %379 = vmatprep.subr.mxu0 0.0
      %380 = vmatpush1.msra.mxu0 0.0
      %381 = vmatprep.subr.mxu0 0.0
      %382 = vmatpush1.msra.mxu0 0.0
      %383 = vmatprep.subr.mxu0 0.0
      %384 = vmatpush1.msra.mxu0 0.0
      %385 = vmatprep.subr.mxu0 0.0
      %386 = vmatpush1.msra.mxu0 0.0
      %387 = vmatprep.subr.mxu0 0.0
      %388 = vmatpush1.msra.mxu0 0.0
      %389 = vmatprep.subr.mxu0 0.0
      %390 = vmatpush1.msra.mxu0 0.0
      %391 = vmatprep.subr.mxu0 0.0
      %392 = vmatpush1.msra.mxu0 0.0
      %393 = vmatprep.subr.mxu0 0.0
      %394 = vmatpush1.msra.mxu0 0.0
      %395 = vmatprep.subr.mxu0 0.0
      %396 = vmatpush1.msra.mxu0 0.0
      %397 = vmatprep.subr.mxu0 0.0
      %398 = vmatpush1.msra.mxu0 0.0
      %399 = vmatprep.subr.mxu0 0.0
      %400 = vmatpush1.msra.mxu0 0.0
      %401 = vmatprep.subr.mxu0 0.0
      %402 = vmatpush1.msra.mxu0 0.0
      %403 = vmatprep.subr.mxu0 0.0
      %404 = vmatpush1.msra.mxu0 0.0
      %405 = vmatprep.subr.mxu0 0.0
      %406 = vmatpush1.msra.mxu0 0.0
      %407 = vmatprep.subr.mxu0 0.0
      %408 = vmatpush1.msra.mxu0 0.0
      %409 = vmatprep.mubr.f32.mxu0 0.0
      %410 = vmatmul.mubr.f32.gmra.mrb[0].mxu0 %v340
      %v411 = vpop.f32.mrb[0].mxu0
      %v412 = vadd.f32 %v331, %v411
      %v413 = vpop.f32.mrb[0].mxu0
      %414 = vmatprep.mubr.f32.mxu0 0.0
      %415 = vmatmul.mubr.f32.gmra.mrb[0].mxu0 %v343
      %v416 = vpop.f32.mrb[0].mxu0
      %v417 = vadd.f32 %v336, %v416
      %v418 = vpop.f32.mrb[0].mxu0
      %419 = vdwg.mxu0
      %v420 = vld [vmem:[#allocation2 + $0x2] sm:$0xff]
      %v421 = vld [vmem:[#allocation2 + $0xa] sm:$0xff]
      %s422 = scalar_lea.vmem %s1, 144
      %v423 = vld [vmem:[%s422] sm:$0xff]
      %v424 = vld [vmem:[%s422 + $0x8] sm:$0xff]
      %v425 = vld [vmem:[%s422 + $0x10] sm:$0xff]
      %v426 = vld [vmem:[%s422 + $0x18] sm:$0xff]
      %v427 = vld [vmem:[%s422 + $0x20] sm:$0xff]
      %v428 = vld [vmem:[%s422 + $0x28] sm:$0xff]
      %v429 = vld [vmem:[%s422 + $0x30] sm:$0xff]
      %v430 = vld [vmem:[%s422 + $0x38] sm:$0xff]
      %v431 = vld [vmem:[%s422 + $0x40] sm:$0xff]
      %v433 = vsel %vm225, %v420, 0
      %v436 = vsel %vm225, %v421, 0
      %438 = vmatprep.subr.mxu0 0.0
      %439 = vmatpush1.msra.mxu0 %v423
      %440 = vmatprep.subr.mxu0 0.0
      %441 = vmatpush1.msra.mxu0 %v424
      %442 = vmatprep.subr.mxu0 0.0
      %443 = vmatpush1.msra.mxu0 %v425
      %444 = vmatprep.subr.mxu0 0.0
      %445 = vmatpush1.msra.mxu0 %v426
      %446 = vmatprep.subr.mxu0 0.0
      %447 = vmatpush1.msra.mxu0 %v427
      %448 = vmatprep.subr.mxu0 0.0
      %449 = vmatpush1.msra.mxu0 %v428
      %450 = vmatprep.subr.mxu0 0.0
      %451 = vmatpush1.msra.mxu0 %v429
      %452 = vmatprep.subr.mxu0 0.0
      %453 = vmatpush1.msra.mxu0 %v430
      %454 = vmatprep.subr.mxu0 0.0
      %455 = vmatpush1.msra.mxu0 %v431
      %456 = vmatprep.subr.mxu0 0.0
      %457 = vmatpush1.msra.mxu0 0.0
      %458 = vmatprep.subr.mxu0 0.0
      %459 = vmatpush1.msra.mxu0 0.0
      %460 = vmatprep.subr.mxu0 0.0
      %461 = vmatpush1.msra.mxu0 0.0
      %462 = vmatprep.subr.mxu0 0.0
      %463 = vmatpush1.msra.mxu0 0.0
      %464 = vmatprep.subr.mxu0 0.0
      %465 = vmatpush1.msra.mxu0 0.0
      %466 = vmatprep.subr.mxu0 0.0
      %467 = vmatpush1.msra.mxu0 0.0
      %468 = vmatprep.subr.mxu0 0.0
      %469 = vmatpush1.msra.mxu0 0.0
      %470 = vmatprep.subr.mxu0 0.0
      %471 = vmatpush1.msra.mxu0 0.0
      %472 = vmatprep.subr.mxu0 0.0
      %473 = vmatpush1.msra.mxu0 0.0
      %474 = vmatprep.subr.mxu0 0.0
      %475 = vmatpush1.msra.mxu0 0.0
      %476 = vmatprep.subr.mxu0 0.0
      %477 = vmatpush1.msra.mxu0 0.0
      %478 = vmatprep.subr.mxu0 0.0
      %479 = vmatpush1.msra.mxu0 0.0
      %480 = vmatprep.subr.mxu0 0.0
      %481 = vmatpush1.msra.mxu0 0.0
      %482 = vmatprep.subr.mxu0 0.0
      %483 = vmatpush1.msra.mxu0 0.0
      %484 = vmatprep.subr.mxu0 0.0
      %485 = vmatpush1.msra.mxu0 0.0
      %486 = vmatprep.subr.mxu0 0.0
      %487 = vmatpush1.msra.mxu0 0.0
      %488 = vmatprep.subr.mxu0 0.0
      %489 = vmatpush1.msra.mxu0 0.0
      %490 = vmatprep.subr.mxu0 0.0
      %491 = vmatpush1.msra.mxu0 0.0
      %492 = vmatprep.subr.mxu0 0.0
      %493 = vmatpush1.msra.mxu0 0.0
      %494 = vmatprep.subr.mxu0 0.0
      %495 = vmatpush1.msra.mxu0 0.0
      %496 = vmatprep.subr.mxu0 0.0
      %497 = vmatpush1.msra.mxu0 0.0
      %498 = vmatprep.subr.mxu0 0.0
      %499 = vmatpush1.msra.mxu0 0.0
      %500 = vmatprep.subr.mxu0 0.0
      %501 = vmatpush1.msra.mxu0 0.0
      %502 = vmatprep.mubr.f32.mxu0 0.0
      %503 = vmatmul.mubr.f32.gmra.mrb[0].mxu0 %v433
      %v504 = vpop.f32.mrb[0].mxu0
      %v505 = vadd.f32 0.0, %v504
      %v506 = vpop.f32.mrb[0].mxu0
      %507 = vmatprep.mubr.f32.mxu0 0.0
      %508 = vmatmul.mubr.f32.gmra.mrb[0].mxu0 %v436
      %v509 = vpop.f32.mrb[0].mxu0
      %v510 = vadd.f32 0.0, %v509
      %v511 = vpop.f32.mrb[0].mxu0
      %512 = vdwg.mxu0
      %v513 = vadd.f32 %v412, %v505
      %v514 = vadd.f32 %v417, %v510
      %v515 = vld [vmem:[%s2] sm:$0x1]
      %v517 = vlaneseq
      %v518 = vshrl.u32 %v517, 7
      %v519 = vsub.s32 0, %v518
      %v520 = vrot.slane %v515, %v519
      %v522 = vadd.f32 %v513, %v520
      %v523 = vadd.f32 %v514, %v520
      %vm524 = vcmp.ge.f32.partialorder %v522, 0.0
      %vm525 = vcmp.ge.f32.partialorder %v523, 0.0
      %v526 = vmul.f32 %v522, 0.2
      %v527 = vmul.f32 %v523, 0.2
      %v528 = vsel %vm524, %v522, %v526
      %v529 = vsel %vm525, %v523, %v527
      %530 = vst [vmem:[#allocation3] sm:$0xff] 0.0
      %vm531 = vcmask 130048
      %532 = vst.msk [vmem:[#allocation3 + $0x8] sm:$0xff] %vm531, 0.0
      %533 = vst [vmem:[#allocation3 + $0x10] sm:$0xff] 0.0
      %534 = vst.msk [vmem:[#allocation3 + $0x18] sm:$0xff] %vm531, 0.0
      %535 = vst [vmem:[#allocation3 + $0x20] sm:$0x3] 0.0
      %vm536 = vcmask 123904
      %537 = vst.msk [vmem:[#allocation3 + $0x28] sm:$0x3] %vm536, 0.0
      %vm540 = vcmask 1040384
      %v541 = vrot.slane %v528, 7
      %v542 = vrot.slane %v529, 7
      %v543 = vsel %vm540, %v541, %v542
      %547 = vst [vmem:[#allocation3] sm:$0xfe] %v541
      %548 = vst [vmem:[#allocation3 + $0x10] sm:$0xff] %v543
      %549 = vst [vmem:[#allocation3 + $0x20] sm:$0x1] %v542
      %v550 = vld [vmem:[#allocation3] sm:$0xff]
      %v551 = vld [vmem:[#allocation3 + $0x8] sm:$0xff]
      %v552 = vld [vmem:[#allocation3 + $0x10] sm:$0xff]
      %v553 = vld [vmem:[#allocation3 + $0x18] sm:$0xff]
      %v554 = vld [vmem:[%s3] sm:$0xff]
      %v555 = vld [vmem:[%s3 + $0x8] sm:$0xff]
      %v556 = vld [vmem:[%s3 + $0x10] sm:$0xff]
      %v557 = vld [vmem:[%s3 + $0x18] sm:$0xff]
      %v558 = vld [vmem:[%s3 + $0x20] sm:$0xff]
      %v559 = vld [vmem:[%s3 + $0x28] sm:$0xff]
      %v560 = vld [vmem:[%s3 + $0x30] sm:$0xff]
      %v561 = vld [vmem:[%s3 + $0x38] sm:$0xff]
      %v562 = vld [vmem:[%s3 + $0x40] sm:$0xff]
      %v563 = vld [vmem:[%s3 + $0x48] sm:$0xff]
      %v564 = vld [vmem:[%s3 + $0x50] sm:$0xff]
      %v565 = vld [vmem:[%s3 + $0x58] sm:$0xff]
      %v566 = vld [vmem:[%s3 + $0x60] sm:$0xff]
      %v567 = vld [vmem:[%s3 + $0x68] sm:$0xff]
      %v568 = vld [vmem:[%s3 + $0x70] sm:$0xff]
      %v569 = vld [vmem:[%s3 + $0x78] sm:$0xff]
      %v570 = vld [vmem:[%s3 + $0x80] sm:$0xff]
      %v571 = vld [vmem:[%s3 + $0x88] sm:$0xff]
      %v572 = vld [vmem:[#allocation3] sm:$0xfe]
      %v573 = vld [vmem:[#allocation3 + $0x8] sm:$0xfe]
      %v574 = vld [vmem:[#allocation3 + $0x20] sm:$0x1]
      %v575 = vld [vmem:[#allocation3 + $0x28] sm:$0x1]
      %s576 = scalar_lea.vmem %s3, 144
      %v577 = vld [vmem:[%s576] sm:$0xff]
      %v578 = vld [vmem:[%s576 + $0x8] sm:$0xff]
      %v579 = vld [vmem:[%s576 + $0x10] sm:$0xff]
      %v580 = vld [vmem:[%s576 + $0x18] sm:$0xff]
      %v581 = vld [vmem:[%s576 + $0x20] sm:$0xff]
      %v582 = vld [vmem:[%s576 + $0x28] sm:$0xff]
      %v583 = vld [vmem:[%s576 + $0x30] sm:$0xff]
      %v584 = vld [vmem:[%s576 + $0x38] sm:$0xff]
      %v585 = vld [vmem:[%s576 + $0x40] sm:$0xff]
      %v586 = vld [vmem:[%s576 + $0x48] sm:$0xff]
      %v587 = vld [vmem:[%s576 + $0x50] sm:$0xff]
      %v588 = vld [vmem:[%s576 + $0x58] sm:$0xff]
      %v589 = vld [vmem:[%s576 + $0x60] sm:$0xff]
      %v590 = vld [vmem:[%s576 + $0x68] sm:$0xff]
      %v591 = vld [vmem:[%s576 + $0x70] sm:$0xff]
      %v592 = vld [vmem:[%s576 + $0x78] sm:$0xff]
      %v593 = vld [vmem:[%s576 + $0x80] sm:$0xff]
      %v594 = vld [vmem:[%s576 + $0x88] sm:$0xff]
      %vm601 = vcmask 1046528
      %v602 = vrot.slane %v572, 1
      %v603 = vrot.slane %v552, 1
      %v604 = vsel %vm601, %v602, %v603
      %v605 = vrot.slane %v573, 1
      %v606 = vrot.slane %v553, 1
      %v607 = vsel %vm601, %v605, %v606
      %v608 = vrot.slane %v574, 1
      %v609 = vsel %vm601, %v603, %v608
      %v610 = vrot.slane %v575, 1
      %v611 = vsel %vm601, %v606, %v610
      %v614 = vsel %vm531, %v607, 0
      %v616 = vsel %vm531, %v611, 0
      %618 = vmatprep.subr.mxu0 0.0
      %619 = vmatpush1.msra.mxu0 %v577
      %620 = vmatprep.subr.mxu0 0.0
      %621 = vmatpush1.msra.mxu0 %v578
      %622 = vmatprep.subr.mxu0 0.0
      %623 = vmatpush1.msra.mxu0 %v579
      %624 = vmatprep.subr.mxu0 0.0
      %625 = vmatpush1.msra.mxu0 %v580
      %626 = vmatprep.subr.mxu0 0.0
      %627 = vmatpush1.msra.mxu0 %v581
      %628 = vmatprep.subr.mxu0 0.0
      %629 = vmatpush1.msra.mxu0 %v582
      %630 = vmatprep.subr.mxu0 0.0
      %631 = vmatpush1.msra.mxu0 %v583
      %632 = vmatprep.subr.mxu0 0.0
      %633 = vmatpush1.msra.mxu0 %v584
      %634 = vmatprep.subr.mxu0 0.0
      %635 = vmatpush1.msra.mxu0 %v585
      %636 = vmatprep.subr.mxu0 0.0
      %637 = vmatpush1.msra.mxu0 %v586
      %638 = vmatprep.subr.mxu0 0.0
      %639 = vmatpush1.msra.mxu0 %v587
      %640 = vmatprep.subr.mxu0 0.0
      %641 = vmatpush1.msra.mxu0 %v588
      %642 = vmatprep.subr.mxu0 0.0
      %643 = vmatpush1.msra.mxu0 %v589
      %644 = vmatprep.subr.mxu0 0.0
      %645 = vmatpush1.msra.mxu0 %v590
      %646 = vmatprep.subr.mxu0 0.0
      %647 = vmatpush1.msra.mxu0 %v591
      %648 = vmatprep.subr.mxu0 0.0
      %649 = vmatpush1.msra.mxu0 %v592
      %650 = vmatprep.subr.mxu0 0.0
      %651 = vmatpush1.msra.mxu0 %v593
      %652 = vmatprep.subr.mxu0 0.0
      %653 = vmatpush1.msra.mxu0 %v594
      %654 = vmatprep.subr.mxu0 0.0
      %655 = vmatpush1.msra.mxu0 0.0
      %656 = vmatprep.subr.mxu0 0.0
      %657 = vmatpush1.msra.mxu0 0.0
      %658 = vmatprep.subr.mxu0 0.0
      %659 = vmatpush1.msra.mxu0 0.0
      %660 = vmatprep.subr.mxu0 0.0
      %661 = vmatpush1.msra.mxu0 0.0
      %662 = vmatprep.subr.mxu0 0.0
      %663 = vmatpush1.msra.mxu0 0.0
      %664 = vmatprep.subr.mxu0 0.0
      %665 = vmatpush1.msra.mxu0 0.0
      %666 = vmatprep.subr.mxu0 0.0
      %667 = vmatpush1.msra.mxu0 0.0
      %668 = vmatprep.subr.mxu0 0.0
      %669 = vmatpush1.msra.mxu0 0.0
      %670 = vmatprep.subr.mxu0 0.0
      %671 = vmatpush1.msra.mxu0 0.0
      %672 = vmatprep.subr.mxu0 0.0
      %673 = vmatpush1.msra.mxu0 0.0
      %674 = vmatprep.subr.mxu0 0.0
      %675 = vmatpush1.msra.mxu0 0.0
      %676 = vmatprep.subr.mxu0 0.0
      %677 = vmatpush1.msra.mxu0 0.0
      %678 = vmatprep.subr.mxu0 0.0
      %679 = vmatpush1.msra.mxu0 0.0
      %680 = vmatprep.subr.mxu0 0.0
      %681 = vmatpush1.msra.mxu0 0.0
      %682 = vmatprep.mubr.f32.mxu0 %v614
      %683 = vmatmul.mubr.f32.gmra.mrb[0].mxu0 %v604
      %v684 = vpop.f32.mrb[0].mxu0
      %v685 = vadd.f32 0.0, %v684
      %v686 = vpop.f32.mrb[0].mxu0
      %687 = vmatprep.mubr.f32.mxu0 %v616
      %688 = vmatmul.mubr.f32.gmra.mrb[0].mxu0 %v609
      %v689 = vpop.f32.mrb[0].mxu0
      %v690 = vadd.f32 0.0, %v689
      %v691 = vpop.f32.mrb[0].mxu0
      %692 = vdwg.mxu0
      %v694 = vsel %vm531, %v551, 0
      %v696 = vsel %vm531, %v553, 0
      %698 = vmatprep.subr.mxu0 0.0
      %699 = vmatpush1.msra.mxu0 %v554
      %700 = vmatprep.subr.mxu0 0.0
      %701 = vmatpush1.msra.mxu0 %v555
      %702 = vmatprep.subr.mxu0 0.0
      %703 = vmatpush1.msra.mxu0 %v556
      %704 = vmatprep.subr.mxu0 0.0
      %705 = vmatpush1.msra.mxu0 %v557
      %706 = vmatprep.subr.mxu0 0.0
      %707 = vmatpush1.msra.mxu0 %v558
      %708 = vmatprep.subr.mxu0 0.0
      %709 = vmatpush1.msra.mxu0 %v559
      %710 = vmatprep.subr.mxu0 0.0
      %711 = vmatpush1.msra.mxu0 %v560
      %712 = vmatprep.subr.mxu0 0.0
      %713 = vmatpush1.msra.mxu0 %v561
      %714 = vmatprep.subr.mxu0 0.0
      %715 = vmatpush1.msra.mxu0 %v562
      %716 = vmatprep.subr.mxu0 0.0
      %717 = vmatpush1.msra.mxu0 %v563
      %718 = vmatprep.subr.mxu0 0.0
      %719 = vmatpush1.msra.mxu0 %v564
      %720 = vmatprep.subr.mxu0 0.0
      %721 = vmatpush1.msra.mxu0 %v565
      %722 = vmatprep.subr.mxu0 0.0
      %723 = vmatpush1.msra.mxu0 %v566
      %724 = vmatprep.subr.mxu0 0.0
      %725 = vmatpush1.msra.mxu0 %v567
      %726 = vmatprep.subr.mxu0 0.0
      %727 = vmatpush1.msra.mxu0 %v568
      %728 = vmatprep.subr.mxu0 0.0
      %729 = vmatpush1.msra.mxu0 %v569
      %730 = vmatprep.subr.mxu0 0.0
      %731 = vmatpush1.msra.mxu0 %v570
      %732 = vmatprep.subr.mxu0 0.0
      %733 = vmatpush1.msra.mxu0 %v571
      %734 = vmatprep.subr.mxu0 0.0
      %735 = vmatpush1.msra.mxu0 0.0
      %736 = vmatprep.subr.mxu0 0.0
      %737 = vmatpush1.msra.mxu0 0.0
      %738 = vmatprep.subr.mxu0 0.0
      %739 = vmatpush1.msra.mxu0 0.0
      %740 = vmatprep.subr.mxu0 0.0
      %741 = vmatpush1.msra.mxu0 0.0
      %742 = vmatprep.subr.mxu0 0.0
      %743 = vmatpush1.msra.mxu0 0.0
      %744 = vmatprep.subr.mxu0 0.0
      %745 = vmatpush1.msra.mxu0 0.0
      %746 = vmatprep.subr.mxu0 0.0
      %747 = vmatpush1.msra.mxu0 0.0
      %748 = vmatprep.subr.mxu0 0.0
      %749 = vmatpush1.msra.mxu0 0.0
      %750 = vmatprep.subr.mxu0 0.0
      %751 = vmatpush1.msra.mxu0 0.0
      %752 = vmatprep.subr.mxu0 0.0
      %753 = vmatpush1.msra.mxu0 0.0
      %754 = vmatprep.subr.mxu0 0.0
      %755 = vmatpush1.msra.mxu0 0.0
      %756 = vmatprep.subr.mxu0 0.0
      %757 = vmatpush1.msra.mxu0 0.0
      %758 = vmatprep.subr.mxu0 0.0
      %759 = vmatpush1.msra.mxu0 0.0
      %760 = vmatprep.subr.mxu0 0.0
      %761 = vmatpush1.msra.mxu0 0.0
      %762 = vmatprep.mubr.f32.mxu0 %v694
      %763 = vmatmul.mubr.f32.gmra.mrb[0].mxu0 %v550
      %v764 = vpop.f32.mrb[0].mxu0
      %v765 = vadd.f32 %v685, %v764
      %v766 = vpop.f32.mrb[0].mxu0
      %767 = vmatprep.mubr.f32.mxu0 %v696
      %768 = vmatmul.mubr.f32.gmra.mrb[0].mxu0 %v552
      %v769 = vpop.f32.mrb[0].mxu0
      %v770 = vadd.f32 %v690, %v769
      %v771 = vpop.f32.mrb[0].mxu0
      %772 = vdwg.mxu0
      %v773 = vld [vmem:[#allocation3] sm:$0xfc]
      %v774 = vld [vmem:[#allocation3 + $0x8] sm:$0xfc]
      %v775 = vld [vmem:[#allocation3 + $0x20] sm:$0x3]
      %v776 = vld [vmem:[#allocation3 + $0x28] sm:$0x3]
      %s777 = scalar_lea.vmem %s3, 288
      %v778 = vld [vmem:[%s777] sm:$0xff]
      %v779 = vld [vmem:[%s777 + $0x8] sm:$0xff]
      %v780 = vld [vmem:[%s777 + $0x10] sm:$0xff]
      %v781 = vld [vmem:[%s777 + $0x18] sm:$0xff]
      %v782 = vld [vmem:[%s777 + $0x20] sm:$0xff]
      %v783 = vld [vmem:[%s777 + $0x28] sm:$0xff]
      %v784 = vld [vmem:[%s777 + $0x30] sm:$0xff]
      %v785 = vld [vmem:[%s777 + $0x38] sm:$0xff]
      %v786 = vld [vmem:[%s777 + $0x40] sm:$0xff]
      %v787 = vld [vmem:[%s777 + $0x48] sm:$0xff]
      %v788 = vld [vmem:[%s777 + $0x50] sm:$0xff]
      %v789 = vld [vmem:[%s777 + $0x58] sm:$0xff]
      %v790 = vld [vmem:[%s777 + $0x60] sm:$0xff]
      %v791 = vld [vmem:[%s777 + $0x68] sm:$0xff]
      %v792 = vld [vmem:[%s777 + $0x70] sm:$0xff]
      %v793 = vld [vmem:[%s777 + $0x78] sm:$0xff]
      %v794 = vld [vmem:[%s777 + $0x80] sm:$0xff]
      %v795 = vld [vmem:[%s777 + $0x88] sm:$0xff]
      %vm800 = vcmask 1045504
      %v801 = vrot.slane %v773, 2
      %v802 = vrot.slane %v552, 2
      %v803 = vsel %vm800, %v801, %v802
      %v804 = vrot.slane %v774, 2
      %v805 = vrot.slane %v553, 2
      %v806 = vsel %vm800, %v804, %v805
      %v807 = vrot.slane %v775, 2
      %v808 = vsel %vm800, %v802, %v807
      %v809 = vrot.slane %v776, 2
      %v810 = vsel %vm800, %v805, %v809
      %v813 = vsel %vm531, %v806, 0
      %v815 = vsel %vm531, %v810, 0
      %817 = vmatprep.subr.mxu0 0.0
      %818 = vmatpush1.msra.mxu0 %v778
      %819 = vmatprep.subr.mxu0 0.0
      %820 = vmatpush1.msra.mxu0 %v779
      %821 = vmatprep.subr.mxu0 0.0
      %822 = vmatpush1.msra.mxu0 %v780
      %823 = vmatprep.subr.mxu0 0.0
      %824 = vmatpush1.msra.mxu0 %v781
      %825 = vmatprep.subr.mxu0 0.0
      %826 = vmatpush1.msra.mxu0 %v782
      %827 = vmatprep.subr.mxu0 0.0
      %828 = vmatpush1.msra.mxu0 %v783
      %829 = vmatprep.subr.mxu0 0.0
      %830 = vmatpush1.msra.mxu0 %v784
      %831 = vmatprep.subr.mxu0 0.0
      %832 = vmatpush1.msra.mxu0 %v785
      %833 = vmatprep.subr.mxu0 0.0
      %834 = vmatpush1.msra.mxu0 %v786
      %835 = vmatprep.subr.mxu0 0.0
      %836 = vmatpush1.msra.mxu0 %v787
      %837 = vmatprep.subr.mxu0 0.0
      %838 = vmatpush1.msra.mxu0 %v788
      %839 = vmatprep.subr.mxu0 0.0
      %840 = vmatpush1.msra.mxu0 %v789
      %841 = vmatprep.subr.mxu0 0.0
      %842 = vmatpush1.msra.mxu0 %v790
      %843 = vmatprep.subr.mxu0 0.0
      %844 = vmatpush1.msra.mxu0 %v791
      %845 = vmatprep.subr.mxu0 0.0
      %846 = vmatpush1.msra.mxu0 %v792
      %847 = vmatprep.subr.mxu0 0.0
      %848 = vmatpush1.msra.mxu0 %v793
      %849 = vmatprep.subr.mxu0 0.0
      %850 = vmatpush1.msra.mxu0 %v794
      %851 = vmatprep.subr.mxu0 0.0
      %852 = vmatpush1.msra.mxu0 %v795
      %853 = vmatprep.subr.mxu0 0.0
      %854 = vmatpush1.msra.mxu0 0.0
      %855 = vmatprep.subr.mxu0 0.0
      %856 = vmatpush1.msra.mxu0 0.0
      %857 = vmatprep.subr.mxu0 0.0
      %858 = vmatpush1.msra.mxu0 0.0
      %859 = vmatprep.subr.mxu0 0.0
      %860 = vmatpush1.msra.mxu0 0.0
      %861 = vmatprep.subr.mxu0 0.0
      %862 = vmatpush1.msra.mxu0 0.0
      %863 = vmatprep.subr.mxu0 0.0
      %864 = vmatpush1.msra.mxu0 0.0
      %865 = vmatprep.subr.mxu0 0.0
      %866 = vmatpush1.msra.mxu0 0.0
      %867 = vmatprep.subr.mxu0 0.0
      %868 = vmatpush1.msra.mxu0 0.0
      %869 = vmatprep.subr.mxu0 0.0
      %870 = vmatpush1.msra.mxu0 0.0
      %871 = vmatprep.subr.mxu0 0.0
      %872 = vmatpush1.msra.mxu0 0.0
      %873 = vmatprep.subr.mxu0 0.0
      %874 = vmatpush1.msra.mxu0 0.0
      %875 = vmatprep.subr.mxu0 0.0
      %876 = vmatpush1.msra.mxu0 0.0
      %877 = vmatprep.subr.mxu0 0.0
      %878 = vmatpush1.msra.mxu0 0.0
      %879 = vmatprep.subr.mxu0 0.0
      %880 = vmatpush1.msra.mxu0 0.0
      %881 = vmatprep.mubr.f32.mxu0 %v813
      %882 = vmatmul.mubr.f32.gmra.mrb[0].mxu0 %v803
      %v883 = vpop.f32.mrb[0].mxu0
      %v884 = vadd.f32 0.0, %v883
      %v885 = vpop.f32.mrb[0].mxu0
      %886 = vmatprep.mubr.f32.mxu0 %v815
      %887 = vmatmul.mubr.f32.gmra.mrb[0].mxu0 %v808
      %v888 = vpop.f32.mrb[0].mxu0
      %v889 = vadd.f32 0.0, %v888
      %v890 = vpop.f32.mrb[0].mxu0
      %891 = vdwg.mxu0
      %v892 = vadd.f32 %v765, %v884
      %v893 = vadd.f32 %v770, %v889
      %v894 = vld [vmem:[%s4] sm:$0x1]
      %v896 = vlaneseq
      %v897 = vshrl.u32 %v896, 7
      %v898 = vsub.s32 0, %v897
      %v899 = vrot.slane %v894, %v898
      %v901 = vadd.f32 %v892, %v899
      %v902 = vadd.f32 %v893, %v899
      %vm903 = vcmp.ge.f32.partialorder %v901, 0.0
      %vm904 = vcmp.ge.f32.partialorder %v902, 0.0
      %v905 = vmul.f32 %v901, 0.2
      %v906 = vmul.f32 %v902, 0.2
      %v907 = vsel %vm903, %v901, %v905
      %v908 = vsel %vm904, %v902, %v906
      %909 = vst [vmem:[%s224] sm:$0xff] %v907
      %910 = vst [vmem:[%s224 + $0x8] sm:$0xff] %v908
      %p911 = scmp.lt.s32.totalorder %s16, 1
      %s912 = scalar_select %p911, %s16, 1
      %s913 = smul.addr %s912, 2
      %s914 = smul.addr %s913, 8
      %s915 = scalar_lea.vmem %s5, %s914
      // Predicated region
      $region41: #{forward.1} parent=39 // pred_check
        %p916 = pneg %p144
      $region42: #{forward.1} parent=39 // pred_check_branch
        %918 = sbr.rel (%p916) target = $region44
      $region43: #{forward.1} parent=39 // pred_region
        _
      $region44: #{forward.1} parent=39 // pred_fallthru
        _
    $region40: #{forward.1} parent=5 // pred_fallthru
      _
    %p919 = scmp.le.s32.totalorder 2, %s11
    // Predicated region
    $region45: #{forward.1} parent=5 // pred_check
      %p920 = pneg %p919
    $region46: #{forward.1} parent=5 // pred_check_branch
      %922 = sbr.rel (%p920) target = $region48
    $region47: #{forward.1} parent=5 // pred_region
      %s923 = ssub.s32 %s11, 2
      // Predicated region
      $region49: #{forward.1} parent=47 // pred_check
        %p924 = pneg %p150
      $region50: #{forward.1} parent=47 // pred_check_branch
        %926 = sbr.rel (%p924) target = $region52
      $region51: #{forward.1} parent=47 // pred_region
        %p927 = scmp.lt.s32.totalorder %s17, 1
        %s928 = scalar_select %p927, %s17, 1
        %s929 = smul.addr %s928, 2
        %s930 = smul.addr %s929, 8
        %s931 = scalar_lea.vmem %s5, %s930
      $region52: #{forward.1} parent=47 // pred_fallthru
        _
    $region48: #{forward.1} parent=5 // pred_fallthru
      _
  $region6: #{forward.1} parent=0 // loop_footer
    %s15 = sadd.s32 1, %s11
  $region7: #{forward.1} parent=0 // loop_footer_branch
    %10 = sbr.rel target = $region3
  $region8: #{forward.1} parent=0 // loop_exit
    _

</llo_original>
